<compile_context>
chip_gen: v5e
topology: v5e:2x2
jax: 0.10.0
libtpu: 0.0.40
codegen_flags: <defaults>
</compile_context>

<pallas_src>
import functools

import jax
import jax.numpy as jnp
from jax.experimental import pallas as pl
from jax.experimental.pallas import tpu as pltpu

_LANE = 128      # lane width (last dim tiling)
_SUBLANE = 8     # f32 sublane count (second-to-last dim tiling)


def _round_up(x, m):
    return ((x + m - 1) // m) * m


# ----------------------------- Pallas kernel --------------------------------


def _decoder_step_kernel(z_ref, c0_ref, w_cat_ref, b_cat_ref, wfc_ref, bfc_ref,
                         logit_ref, hn_ref, cn_ref, *, hid_pad):
    """Fused single-step decoder.

    z_ref     : (Bp, E + Hp)   = [x_emb | h0]   (fused recurrent-matmul operand)
    c0_ref    : (Bp, Hp)
    w_cat_ref : (E + Hp, 4*Hp) gate-padded [W_ih; W_hh]^T  (gate order i, f, g, o)
    b_cat_ref : (1, 4*Hp)      gate-padded b_ih + b_hh
    wfc_ref   : (Hp, Vp)       padded W_fc^T
    bfc_ref   : (1, Vp)        padded b_fc
    outputs   : logit (Bp, Vp), hn (Bp, Hp), cn (Bp, Hp)
    """
    Hp = hid_pad

    # One fused MXU matmul for both the input and the recurrent projection.
    gates = (jnp.dot(z_ref[...], w_cat_ref[...],
                     preferred_element_type=jnp.float32) + b_cat_ref[...])

    # Each gate block is a whole 128-lane-multiple tile (no sub-lane slicing).
    i = jax.nn.sigmoid(gates[:, 0 * Hp:1 * Hp])
    f = jax.nn.sigmoid(gates[:, 1 * Hp:2 * Hp])
    g = jnp.tanh(gates[:, 2 * Hp:3 * Hp])
    o = jax.nn.sigmoid(gates[:, 3 * Hp:4 * Hp])

    c_new = f * c0_ref[...] + i * g
    h_new = o * jnp.tanh(c_new)

    cn_ref[...] = c_new
    hn_ref[...] = h_new

    # Fused vocab projection (lane-dense padded output).
    logit_ref[...] = (jnp.dot(h_new, wfc_ref[...],
                              preferred_element_type=jnp.float32) + bfc_ref[...])


# ----------------------------- weight packing --------------------------------


def pack_decoder_params(params):
    """Offline layout packing (done once, outside the kernel).

    Builds a single fused, gate-padded weight matrix so the kernel does one MXU
    matmul and every gate slice / output store is a whole (8,128) tile.
    """
    w_ih = jnp.asarray(params["wih"], jnp.float32)    # (4H, E)
    w_hh = jnp.asarray(params["whh"], jnp.float32)    # (4H, H)
    fc_w = jnp.asarray(params["fc_w"], jnp.float32)   # (V, H)
    fc_b = jnp.asarray(params["fc_b"], jnp.float32)   # (V,)
    bias = (jnp.asarray(params["bih"], jnp.float32)
            + jnp.asarray(params["bhh"], jnp.float32))  # (4H,)

    E = w_ih.shape[1]
    H = w_hh.shape[1]
    V = fc_w.shape[0]
    Hp = _round_up(H, _LANE)
    Vp = _round_up(V, _LANE)

    # rows [0:E)   = W_ih^T, rows [E:E+H) = W_hh^T, remaining rows zero.
    # column block k*Hp : k*Hp+H holds gate k (PyTorch order i, f, g, o);
    # the padded columns are zero, so padded gate lanes evaluate to exactly 0
    # state (sigmoid(0)*0 terms), keeping hn/cn/logit correct after slicing.
    w_cat = jnp.zeros((E + Hp, 4 * Hp), jnp.float32)
    b_cat = jnp.zeros((1, 4 * Hp), jnp.float32)
    for k in range(4):
        w_cat = w_cat.at[:E, k * Hp:k * Hp + H].set(w_ih[k * H:(k + 1) * H].T)
        w_cat = w_cat.at[E:E + H, k * Hp:k * Hp + H].set(w_hh[k * H:(k + 1) * H].T)
        b_cat = b_cat.at[0, k * Hp:k * Hp + H].set(bias[k * H:(k + 1) * H])

    wfc_t = jnp.zeros((Hp, Vp), jnp.float32).at[:H, :V].set(fc_w.T)
    bfc = jnp.zeros((1, Vp), jnp.float32).at[0, :V].set(fc_b)

    packed = dict(emb=jnp.asarray(params["emb"], jnp.float32),
                  w_cat=w_cat, b_cat=b_cat, wfc_t=wfc_t, bfc=bfc)
    dims = (E, H, V)
    return packed, dims


# ----------------------------- forward wrapper -------------------------------


def decoder_forward(packed, x, h0, c0, *, dims):
    """x: (B,) int32 tokens; h0, c0: (1, B, H).  Returns (logit, (hn, cn))."""
    E, H, V = dims
    assert h0.shape[0] == 1 and c0.shape[0] == 1, "num_layers=1 supported"
    B = x.shape[0]
    Bp = _round_up(max(B, _SUBLANE), _SUBLANE)
    Hp, Vp = packed["wfc_t"].shape

    # Embedding gather is data-dependent row indexing -> left to XLA (glue).
    x_emb = jnp.take(packed["emb"], x, axis=0)                       # (B, E)
    h0_2d = h0.reshape(B, H).astype(jnp.float32)
    c0_2d = c0.reshape(B, H).astype(jnp.float32)

    # Pad batch to a sublane multiple, hidden to a lane multiple, and build the
    # fused [x_emb | h0] operand once (layout plumbing, not compute hoisting).
    z = jnp.zeros((Bp, E + Hp), jnp.float32)
    z = z.at[:B, :E].set(x_emb)
    z = z.at[:B, E:E + H].set(h0_2d)
    c0_p = jnp.zeros((Bp, Hp), jnp.float32).at[:B, :H].set(c0_2d)

    kernel = functools.partial(_decoder_step_kernel, hid_pad=Hp)
    logit_p, hn_p, cn_p = pl.pallas_call(
        kernel,
        out_shape=(
            jax.ShapeDtypeStruct((Bp, Vp), jnp.float32),
            jax.ShapeDtypeStruct((Bp, Hp), jnp.float32),
            jax.ShapeDtypeStruct((Bp, Hp), jnp.float32),
        ),
        in_specs=[pl.BlockSpec(memory_space=pltpu.MemorySpace.VMEM)] * 6,
        out_specs=(pl.BlockSpec(memory_space=pltpu.MemorySpace.VMEM),) * 3,
    )(z, c0_p, packed["w_cat"], packed["b_cat"], packed["wfc_t"], packed["bfc"])

    logit = logit_p[:B, :V]
    hn = hn_p[:B, :H].reshape(1, B, H)
    cn = cn_p[:B, :H].reshape(1, B, H)
    return logit, (hn, cn)


# ----------------------------- pure-JAX reference ----------------------------


def decoder_ref(params, x, h0, c0):
    H = params["whh"].shape[1]
    emb = params["emb"][x]                           # (B, E)
    h, c = h0[0], c0[0]
    gates = (emb @ params["wih"].T + h @ params["whh"].T
             + params["bih"] + params["bhh"])        # (B, 4H) gate order i,f,g,o
    i = jax.nn.sigmoid(gates[:, 0 * H:1 * H])
    f = jax.nn.sigmoid(gates[:, 1 * H:2 * H])
    g = jnp.tanh(gates[:, 2 * H:3 * H])
    o = jax.nn.sigmoid(gates[:, 3 * H:4 * H])
    c_new = f * c + i * g
    h_new = o * jnp.tanh(c_new)
    logit = h_new @ params["fc_w"].T + params["fc_b"]
    return logit, (h_new[None], c_new[None])


# ----------------------------- params & main ---------------------------------


def init_params(key, v_src, e_dim, hid, v_tgt):
    ks = jax.random.split(key, 7)
    u = lambda k, shape, s=0.1: jax.random.uniform(k, shape, jnp.float32, -s, s)
    return dict(
        emb=u(ks[0], (v_src, e_dim)),
        wih=u(ks[1], (4 * hid, e_dim)),
        whh=u(ks[2], (4 * hid, hid)),
        bih=u(ks[3], (4 * hid,)),
        bhh=u(ks[4], (4 * hid,)),
        fc_w=u(ks[5], (v_tgt, hid)),
        fc_b=u(ks[6], (v_tgt,)),
    )


if __name__ == "__main__":
    V_SRC, V_TGT = 16, 12
    EMB, HID, NUM_LAYERS = 16, 32, 1
    BATCH = 2

    key = jax.random.PRNGKey(0)
    kp, kx, kh, kc = jax.random.split(key, 4)
    params = init_params(kp, V_SRC, EMB, HID, V_TGT)

    x = jax.random.randint(kx, (BATCH,), 0, V_SRC, dtype=jnp.int32)
    h0 = 0.1 * jax.random.normal(kh, (NUM_LAYERS, BATCH, HID), jnp.float32)
    c0 = 0.1 * jax.random.normal(kc, (NUM_LAYERS, BATCH, HID), jnp.float32)

    packed, dims = pack_decoder_params(params)
    forward = jax.jit(functools.partial(decoder_forward, dims=dims))

    logit, (hn, cn) = forward(packed, x, h0, c0)
    logit = jax.block_until_ready(logit)

    assert logit.shape == (BATCH, V_TGT), logit.shape
    assert hn.shape == (NUM_LAYERS, BATCH, HID), hn.shape
    assert cn.shape == (NUM_LAYERS, BATCH, HID), cn.shape

    ref_logit, (ref_hn, ref_cn) = decoder_ref(params, x, h0, c0)
    ok = (jnp.allclose(logit, ref_logit, atol=1e-5, rtol=1e-5)
          and jnp.allclose(hn, ref_hn, atol=1e-5, rtol=1e-5)
          and jnp.allclose(cn, ref_cn, atol=1e-5, rtol=1e-5))
    if not ok:
        raise AssertionError("Pallas Decoder output mismatch vs JAX reference")

    print("KERNEL_OK")
</pallas_src>

<mosaic_0001>
module attributes {stable_mosaic.version = 11 : i64} {
  func.func @_decoder_step_kernel(%arg0: memref<8x144xf32, #tpu.memory_space<vmem>>, %arg1: memref<8x128xf32, #tpu.memory_space<vmem>>, %arg2: memref<144x512xf32, #tpu.memory_space<vmem>>, %arg3: memref<1x512xf32, #tpu.memory_space<vmem>>, %arg4: memref<128x128xf32, #tpu.memory_space<vmem>>, %arg5: memref<1x128xf32, #tpu.memory_space<vmem>>, %arg6: memref<8x128xf32, #tpu.memory_space<vmem>>, %arg7: memref<8x128xf32, #tpu.memory_space<vmem>>, %arg8: memref<8x128xf32, #tpu.memory_space<vmem>>) attributes {dimension_semantics = [], scalar_prefetch = 0 : i64, scratch_operands = 0 : i64, tpu.core_type = #tpu.core_type<tc>} {
    %c0 = arith.constant 0 : index
    %c0_0 = arith.constant 0 : index
    %0 = vector.load %arg0[%c0, %c0_0] : memref<8x144xf32, #tpu.memory_space<vmem>>, vector<8x144xf32>
    %c0_1 = arith.constant 0 : index
    %c0_2 = arith.constant 0 : index
    %1 = vector.load %arg2[%c0_1, %c0_2] : memref<144x512xf32, #tpu.memory_space<vmem>>, vector<144x512xf32>
    %cst = arith.constant dense<0.000000e+00> : vector<8x512xf32>
    %2 = tpu.matmul %0, %1, %cst {dimension_numbers = #tpu.dot_dimension_numbers<[1], [0], [0], [1], [0, 0, 1, 1], [], []>} : vector<8x144xf32>, vector<144x512xf32>, vector<8x512xf32> -> vector<8x512xf32>
    %c0_3 = arith.constant 0 : index
    %c0_4 = arith.constant 0 : index
    %3 = vector.load %arg3[%c0_3, %c0_4] : memref<1x512xf32, #tpu.memory_space<vmem>>, vector<1x512xf32>
    %4 = vector.broadcast %3 : vector<1x512xf32> to vector<8x512xf32>
    %5 = arith.addf %2, %4 : vector<8x512xf32>
    %6 = vector.extract_strided_slice %5 {offsets = [0, 0], sizes = [8, 128], strides = [1, 1]} : vector<8x512xf32> to vector<8x128xf32>
    %7 = arith.negf %6 : vector<8x128xf32>
    %8 = math.exp %7 : vector<8x128xf32>
    %cst_5 = arith.constant 1.000000e+00 : f32
    %9 = vector.broadcast %cst_5 : f32 to vector<8x128xf32>
    %10 = arith.addf %9, %8 : vector<8x128xf32>
    %11 = arith.divf %9, %10 : vector<8x128xf32>
    %12 = vector.extract_strided_slice %5 {offsets = [0, 128], sizes = [8, 128], strides = [1, 1]} : vector<8x512xf32> to vector<8x128xf32>
    %13 = arith.negf %12 : vector<8x128xf32>
    %14 = math.exp %13 : vector<8x128xf32>
    %cst_6 = arith.constant 1.000000e+00 : f32
    %15 = vector.broadcast %cst_6 : f32 to vector<8x128xf32>
    %16 = arith.addf %15, %14 : vector<8x128xf32>
    %17 = arith.divf %15, %16 : vector<8x128xf32>
    %18 = vector.extract_strided_slice %5 {offsets = [0, 256], sizes = [8, 128], strides = [1, 1]} : vector<8x512xf32> to vector<8x128xf32>
    %19 = math.tanh %18 : vector<8x128xf32>
    %20 = vector.extract_strided_slice %5 {offsets = [0, 384], sizes = [8, 128], strides = [1, 1]} : vector<8x512xf32> to vector<8x128xf32>
    %21 = arith.negf %20 : vector<8x128xf32>
    %22 = math.exp %21 : vector<8x128xf32>
    %cst_7 = arith.constant 1.000000e+00 : f32
    %23 = vector.broadcast %cst_7 : f32 to vector<8x128xf32>
    %24 = arith.addf %23, %22 : vector<8x128xf32>
    %25 = arith.divf %23, %24 : vector<8x128xf32>
    %c0_8 = arith.constant 0 : index
    %c0_9 = arith.constant 0 : index
    %26 = vector.load %arg1[%c0_8, %c0_9] : memref<8x128xf32, #tpu.memory_space<vmem>>, vector<8x128xf32>
    %27 = arith.mulf %17, %26 : vector<8x128xf32>
    %28 = arith.mulf %11, %19 : vector<8x128xf32>
    %29 = arith.addf %27, %28 : vector<8x128xf32>
    %30 = math.tanh %29 : vector<8x128xf32>
    %31 = arith.mulf %25, %30 : vector<8x128xf32>
    %c0_10 = arith.constant 0 : index
    %c0_11 = arith.constant 0 : index
    %32 = vector.load %arg8[%c0_10, %c0_11] : memref<8x128xf32, #tpu.memory_space<vmem>>, vector<8x128xf32>
    tpu.vector_store %arg8[%c0_10, %c0_11], %29 {strides = array<i32>} : memref<8x128xf32, #tpu.memory_space<vmem>>, vector<8x128xf32>,
    %c0_12 = arith.constant 0 : index
    %c0_13 = arith.constant 0 : index
    %33 = vector.load %arg7[%c0_12, %c0_13] : memref<8x128xf32, #tpu.memory_space<vmem>>, vector<8x128xf32>
    tpu.vector_store %arg7[%c0_12, %c0_13], %31 {strides = array<i32>} : memref<8x128xf32, #tpu.memory_space<vmem>>, vector<8x128xf32>,
    %c0_14 = arith.constant 0 : index
    %c0_15 = arith.constant 0 : index
    %34 = vector.load %arg4[%c0_14, %c0_15] : memref<128x128xf32, #tpu.memory_space<vmem>>, vector<128x128xf32>
    %cst_16 = arith.constant dense<0.000000e+00> : vector<8x128xf32>
    %35 = tpu.matmul %31, %34, %cst_16 {dimension_numbers = #tpu.dot_dimension_numbers<[1], [0], [0], [1], [0, 0, 1, 1], [], []>} : vector<8x128xf32>, vector<128x128xf32>, vector<8x128xf32> -> vector<8x128xf32>
    %c0_17 = arith.constant 0 : index
    %c0_18 = arith.constant 0 : index
    %36 = vector.load %arg5[%c0_17, %c0_18] : memref<1x128xf32, #tpu.memory_space<vmem>>, vector<1x128xf32>
    %37 = vector.broadcast %36 : vector<1x128xf32> to vector<8x128xf32>
    %38 = arith.addf %35, %37 : vector<8x128xf32>
    %c0_19 = arith.constant 0 : index
    %c0_20 = arith.constant 0 : index
    %39 = vector.load %arg6[%c0_19, %c0_20] : memref<8x128xf32, #tpu.memory_space<vmem>>, vector<8x128xf32>
    tpu.vector_store %arg6[%c0_19, %c0_20], %38 {strides = array<i32>} : memref<8x128xf32, #tpu.memory_space<vmem>>, vector<8x128xf32>,
    return
  }
}

</mosaic_0001>

<llo_original>
// kernel: decoder_forward.1
$region0: #{decoder_forward.1}
  #allocation0 [shape = 'u32[]', space=smem, size = 0x4, offset = 0x4, fixed_abs, tag = 'smem constant byte address 0x4 - core index']
  #allocation1 [shape = 'u32[72,128]{1,0:T(1,128)}', space=vmem, size = 0x9000, scoped, tag = 'internal scratch']
  %s0 = inlined_call_operand.vmem [shape: f32[8,144], index: 0, kind: input, shape index: {}]
  %s1 = inlined_call_operand.vmem [shape: f32[8,128], index: 1, kind: input, shape index: {}]
  %s2 = inlined_call_operand.hbm [shape: f32[144,512], index: 2, kind: input, shape index: {}]
  %s3 = inlined_call_operand.vmem [shape: f32[1,512], index: 3, kind: input, shape index: {}]
  %s4 = inlined_call_operand.hbm [shape: f32[128,128], index: 4, kind: input, shape index: {}]
  %s5 = inlined_call_operand.vmem [shape: f32[1,128], index: 5, kind: input, shape index: {}]
  %s6 = inlined_call_operand.vmem [shape: f32[8,128], index: 6, kind: output, shape index: {0}]
  %s7 = inlined_call_operand.vmem [shape: f32[8,128], index: 7, kind: output, shape index: {1}]
  %s8 = inlined_call_operand.vmem [shape: f32[8,128], index: 8, kind: output, shape index: {2}]
  %9 = xla_tuple %s6, %s7, %s8
  %s10 = sld [smem:[#allocation0]]
  $region58: #{decoder_forward.1} parent=0
    _
  %s12 = ssub.s32 1, %s10
  %s13 = scalar_select 0, %s12, %s10
  $region1: #{decoder_forward.1} parent=0
    #allocation2 [shape = 'u8[294912]{0}', space=vmem, size = 0x48000, scoped, tag = 'input window, operand 2, single buffered']
    #allocation3 [shape = 's32[1]{0}', space=sflag, size = 0x4, scoped, tag = 'scoped memory for decoder_forward.1']
    #allocation4 [shape = 'u8[65536]{0}', space=vmem, size = 0x10000, scoped, tag = 'input window, operand 4, single buffered']
    #allocation5 [shape = 's32[1]{0}', space=sflag, size = 0x4, scoped, tag = 'scoped memory for decoder_forward.1']
    %14 = vsyncpa [#allocation3], 0
    %15 = vsyncpa [#allocation5], 0
    // Predicated region
    $region2: #{decoder_forward.1} parent=1 // pred_check
      _
    $region3: #{decoder_forward.1} parent=1 // pred_check_branch
      %17 = sbr.rel (0) target = $region5
    $region4: #{decoder_forward.1} parent=1 // pred_region
      _
    $region5: #{decoder_forward.1} parent=1 // pred_fallthru
      _
    // Predicated region
    $region6: #{decoder_forward.1} parent=1 // pred_check
      _
    $region7: #{decoder_forward.1} parent=1 // pred_check_branch
      %19 = sbr.rel (0) target = $region9
    $region8: #{decoder_forward.1} parent=1 // pred_region
      _
    $region9: #{decoder_forward.1} parent=1 // pred_fallthru
      _
    // Predicated region
    $region10: #{decoder_forward.1} parent=1 // pred_check
      _
    $region11: #{decoder_forward.1} parent=1 // pred_check_branch
      %21 = sbr.rel (0) target = $region13
    $region12: #{decoder_forward.1} parent=1 // pred_region
      %23 = vsyncadd [#allocation3], 0
      %s24 = sshll.u32 %s2, 4
      %s25 = int_to_ptr.hbm [resolvable:$true] %s24
      %s26 = sshll.u32 [#allocation2], 4
      %s27 = int_to_ptr.vmem [resolvable:$true] %s26
      %32 = dma.hbm_to_vmem [thread:$0]  %s25, 9216, %s27, [#allocation3], 512, 512, 32
    $region13: #{decoder_forward.1} parent=1 // pred_fallthru
      _
    // Predicated region
    $region14: #{decoder_forward.1} parent=1 // pred_check
      _
    $region15: #{decoder_forward.1} parent=1 // pred_check_branch
      %34 = sbr.rel (0) target = $region17
    $region16: #{decoder_forward.1} parent=1 // pred_region
      _
    $region17: #{decoder_forward.1} parent=1 // pred_fallthru
      _
    // Predicated region
    $region18: #{decoder_forward.1} parent=1 // pred_check
      _
    $region19: #{decoder_forward.1} parent=1 // pred_check_branch
      %36 = sbr.rel (0) target = $region21
    $region20: #{decoder_forward.1} parent=1 // pred_region
      %38 = vsyncadd [#allocation5], 0
      %s39 = sshll.u32 %s4, 4
      %s40 = int_to_ptr.hbm [resolvable:$true] %s39
      %s41 = sshll.u32 [#allocation4], 4
      %s42 = int_to_ptr.vmem [resolvable:$true] %s41
      %47 = dma.hbm_to_vmem [thread:$0]  %s40, 2048, %s42, [#allocation5], 128, 128, 8
    $region21: #{decoder_forward.1} parent=1 // pred_fallthru
      _
    // Predicated region
    $region22: #{decoder_forward.1} parent=1 // pred_check
      _
    $region23: #{decoder_forward.1} parent=1 // pred_check_branch
      %49 = sbr.rel (0) target = $region25
    $region24: #{decoder_forward.1} parent=1 // pred_region
      _
    $region25: #{decoder_forward.1} parent=1 // pred_fallthru
      _
    // Predicated region
    $region26: #{decoder_forward.1} parent=1 // pred_check
      _
    $region27: #{decoder_forward.1} parent=1 // pred_check_branch
      %51 = sbr.rel (0) target = $region29
    $region28: #{decoder_forward.1} parent=1 // pred_region
      %53 = dma.done [#allocation3], 9216
    $region29: #{decoder_forward.1} parent=1 // pred_fallthru
      _
    // Predicated region
    $region30: #{decoder_forward.1} parent=1 // pred_check
      _
    $region31: #{decoder_forward.1} parent=1 // pred_check_branch
      %55 = sbr.rel (0) target = $region33
    $region32: #{decoder_forward.1} parent=1 // pred_region
      %57 = dma.done [#allocation5], 2048
    $region33: #{decoder_forward.1} parent=1 // pred_fallthru
      _
    %v58 = vld [vmem:[%s0] sm:$0xff]
    %v59 = vld [vmem:[%s0 + $0x8] sm:$0xff]
    %v60 = vld [vmem:[#allocation2] sm:$0xff]
    %v61 = vld [vmem:[#allocation2 + $0x8] sm:$0xff]
    %v62 = vld [vmem:[#allocation2 + $0x10] sm:$0xff]
    %v63 = vld [vmem:[#allocation2 + $0x18] sm:$0xff]
    %v64 = vld [vmem:[#allocation2 + $0x20] sm:$0xff]
    %v65 = vld [vmem:[#allocation2 + $0x28] sm:$0xff]
    %v66 = vld [vmem:[#allocation2 + $0x30] sm:$0xff]
    %v67 = vld [vmem:[#allocation2 + $0x38] sm:$0xff]
    %v68 = vld [vmem:[#allocation2 + $0x40] sm:$0xff]
    %v69 = vld [vmem:[#allocation2 + $0x48] sm:$0xff]
    %v70 = vld [vmem:[#allocation2 + $0x50] sm:$0xff]
    %v71 = vld [vmem:[#allocation2 + $0x58] sm:$0xff]
    %v72 = vld [vmem:[#allocation2 + $0x60] sm:$0xff]
    %v73 = vld [vmem:[#allocation2 + $0x68] sm:$0xff]
    %v74 = vld [vmem:[#allocation2 + $0x70] sm:$0xff]
    %v75 = vld [vmem:[#allocation2 + $0x78] sm:$0xff]
    %v76 = vld [vmem:[#allocation2 + $0x80] sm:$0xff]
    %v77 = vld [vmem:[#allocation2 + $0x88] sm:$0xff]
    %v78 = vld [vmem:[#allocation2 + $0x90] sm:$0xff]
    %v79 = vld [vmem:[#allocation2 + $0x98] sm:$0xff]
    %v80 = vld [vmem:[#allocation2 + $0xa0] sm:$0xff]
    %v81 = vld [vmem:[#allocation2 + $0xa8] sm:$0xff]
    %v82 = vld [vmem:[#allocation2 + $0xb0] sm:$0xff]
    %v83 = vld [vmem:[#allocation2 + $0xb8] sm:$0xff]
    %v84 = vld [vmem:[#allocation2 + $0xc0] sm:$0xff]
    %v85 = vld [vmem:[#allocation2 + $0xc8] sm:$0xff]
    %v86 = vld [vmem:[#allocation2 + $0xd0] sm:$0xff]
    %v87 = vld [vmem:[#allocation2 + $0xd8] sm:$0xff]
    %v88 = vld [vmem:[#allocation2 + $0xe0] sm:$0xff]
    %v89 = vld [vmem:[#allocation2 + $0xe8] sm:$0xff]
    %v90 = vld [vmem:[#allocation2 + $0xf0] sm:$0xff]
    %v91 = vld [vmem:[#allocation2 + $0xf8] sm:$0xff]
    %v92 = vld [vmem:[#allocation2 + $0x100] sm:$0xff]
    %v93 = vld [vmem:[#allocation2 + $0x108] sm:$0xff]
    %v94 = vld [vmem:[#allocation2 + $0x110] sm:$0xff]
    %v95 = vld [vmem:[#allocation2 + $0x118] sm:$0xff]
    %v96 = vld [vmem:[#allocation2 + $0x120] sm:$0xff]
    %v97 = vld [vmem:[#allocation2 + $0x128] sm:$0xff]
    %v98 = vld [vmem:[#allocation2 + $0x130] sm:$0xff]
    %v99 = vld [vmem:[#allocation2 + $0x138] sm:$0xff]
    %v100 = vld [vmem:[#allocation2 + $0x140] sm:$0xff]
    %v101 = vld [vmem:[#allocation2 + $0x148] sm:$0xff]
    %v102 = vld [vmem:[#allocation2 + $0x150] sm:$0xff]
    %v103 = vld [vmem:[#allocation2 + $0x158] sm:$0xff]
    %v104 = vld [vmem:[#allocation2 + $0x160] sm:$0xff]
    %v105 = vld [vmem:[#allocation2 + $0x168] sm:$0xff]
    %v106 = vld [vmem:[#allocation2 + $0x170] sm:$0xff]
    %v107 = vld [vmem:[#allocation2 + $0x178] sm:$0xff]
    %v108 = vld [vmem:[#allocation2 + $0x180] sm:$0xff]
    %v109 = vld [vmem:[#allocation2 + $0x188] sm:$0xff]
    %v110 = vld [vmem:[#allocation2 + $0x190] sm:$0xff]
    %v111 = vld [vmem:[#allocation2 + $0x198] sm:$0xff]
    %v112 = vld [vmem:[#allocation2 + $0x1a0] sm:$0xff]
    %v113 = vld [vmem:[#allocation2 + $0x1a8] sm:$0xff]
    %v114 = vld [vmem:[#allocation2 + $0x1b0] sm:$0xff]
    %v115 = vld [vmem:[#allocation2 + $0x1b8] sm:$0xff]
    %v116 = vld [vmem:[#allocation2 + $0x1c0] sm:$0xff]
    %v117 = vld [vmem:[#allocation2 + $0x1c8] sm:$0xff]
    %v118 = vld [vmem:[#allocation2 + $0x1d0] sm:$0xff]
    %v119 = vld [vmem:[#allocation2 + $0x1d8] sm:$0xff]
    %v120 = vld [vmem:[#allocation2 + $0x1e0] sm:$0xff]
    %v121 = vld [vmem:[#allocation2 + $0x1e8] sm:$0xff]
    %v122 = vld [vmem:[#allocation2 + $0x1f0] sm:$0xff]
    %v123 = vld [vmem:[#allocation2 + $0x1f8] sm:$0xff]
    %v124 = vld [vmem:[#allocation2 + $0x200] sm:$0xff]
    %v125 = vld [vmem:[#allocation2 + $0x208] sm:$0xff]
    %v126 = vld [vmem:[#allocation2 + $0x210] sm:$0xff]
    %v127 = vld [vmem:[#allocation2 + $0x218] sm:$0xff]
    %v128 = vld [vmem:[#allocation2 + $0x220] sm:$0xff]
    %v129 = vld [vmem:[#allocation2 + $0x228] sm:$0xff]
    %v130 = vld [vmem:[#allocation2 + $0x230] sm:$0xff]
    %v131 = vld [vmem:[#allocation2 + $0x238] sm:$0xff]
    %v132 = vld [vmem:[%s3] sm:$0xf]
    %v134 = vperm.slane %v132, 0
    %v135 = vperm.slane %v132, 1
    %v136 = vperm.slane %v132, 2
    %v137 = vperm.slane %v132, 3
    %vm142 = vcmask 130048
    %v144 = vsel %vm142, %v59, 0
    %146 = vmatpush.msra.mxu0 %v120
    %147 = vmatpush.msra.mxu0 %v116
    %148 = vmatpush.msra.mxu0 %v112
    %149 = vmatpush.msra.mxu0 %v108
    %150 = vmatpush.msra.mxu0 %v104
    %151 = vmatpush.msra.mxu0 %v100
    %152 = vmatpush.msra.mxu0 %v96
    %153 = vmatpush.msra.mxu0 %v92
    %154 = vmatpush.msra.mxu0 %v88
    %155 = vmatpush.msra.mxu0 %v84
    %156 = vmatpush.msra.mxu0 %v80
    %157 = vmatpush.msra.mxu0 %v76
    %158 = vmatpush.msra.mxu0 %v72
    %159 = vmatpush.msra.mxu0 %v68
    %160 = vmatpush.msra.mxu0 %v64
    %161 = vmatpush.msra.mxu0 %v60
    %162 = vmatmul.f32.gmra.mxu0 %v58
    %v163 = vpop.f32.mrf.mxu0
    %v164 = vadd.f32 %v134, %v163
    %165 = vdwg.mxu0
    %166 = vmatpush.msra.mxu0 0.0
    %167 = vmatpush.msra.mxu0 0.0
    %168 = vmatpush.msra.mxu0 0.0
    %169 = vmatpush.msra.mxu0 0.0
    %170 = vmatpush.msra.mxu0 0.0
    %171 = vmatpush.msra.mxu0 0.0
    %172 = vmatpush.msra.mxu0 0.0
    %173 = vmatpush.msra.mxu0 0.0
    %174 = vmatpush.msra.mxu0 0.0
    %175 = vmatpush.msra.mxu0 0.0
    %176 = vmatpush.msra.mxu0 0.0
    %177 = vmatpush.msra.mxu0 0.0
    %178 = vmatpush.msra.mxu0 0.0
    %179 = vmatpush.msra.mxu0 0.0
    %180 = vmatpush.msra.mxu0 %v128
    %181 = vmatpush.msra.mxu0 %v124
    %182 = vmatmul.f32.gmra.mxu0 %v144
    %v183 = vpop.f32.mrf.mxu0
    %v184 = vadd.f32 %v164, %v183
    %185 = vdwg.mxu0
    %186 = vmatpush.msra.mxu0 %v121
    %187 = vmatpush.msra.mxu0 %v117
    %188 = vmatpush.msra.mxu0 %v113
    %189 = vmatpush.msra.mxu0 %v109
    %190 = vmatpush.msra.mxu0 %v105
    %191 = vmatpush.msra.mxu0 %v101
    %192 = vmatpush.msra.mxu0 %v97
    %193 = vmatpush.msra.mxu0 %v93
    %194 = vmatpush.msra.mxu0 %v89
    %195 = vmatpush.msra.mxu0 %v85
    %196 = vmatpush.msra.mxu0 %v81
    %197 = vmatpush.msra.mxu0 %v77
    %198 = vmatpush.msra.mxu0 %v73
    %199 = vmatpush.msra.mxu0 %v69
    %200 = vmatpush.msra.mxu0 %v65
    %201 = vmatpush.msra.mxu0 %v61
    %202 = vmatmul.f32.gmra.mxu0 %v58
    %v203 = vpop.f32.mrf.mxu0
    %v204 = vadd.f32 %v135, %v203
    %205 = vdwg.mxu0
    %206 = vmatpush.msra.mxu0 0.0
    %207 = vmatpush.msra.mxu0 0.0
    %208 = vmatpush.msra.mxu0 0.0
    %209 = vmatpush.msra.mxu0 0.0
    %210 = vmatpush.msra.mxu0 0.0
    %211 = vmatpush.msra.mxu0 0.0
    %212 = vmatpush.msra.mxu0 0.0
    %213 = vmatpush.msra.mxu0 0.0
    %214 = vmatpush.msra.mxu0 0.0
    %215 = vmatpush.msra.mxu0 0.0
    %216 = vmatpush.msra.mxu0 0.0
    %217 = vmatpush.msra.mxu0 0.0
    %218 = vmatpush.msra.mxu0 0.0
    %219 = vmatpush.msra.mxu0 0.0
    %220 = vmatpush.msra.mxu0 %v129
    %221 = vmatpush.msra.mxu0 %v125
    %222 = vmatmul.f32.gmra.mxu0 %v144
    %v223 = vpop.f32.mrf.mxu0
    %v224 = vadd.f32 %v204, %v223
    %225 = vdwg.mxu0
    %226 = vmatpush.msra.mxu0 %v122
    %227 = vmatpush.msra.mxu0 %v118
    %228 = vmatpush.msra.mxu0 %v114
    %229 = vmatpush.msra.mxu0 %v110
    %230 = vmatpush.msra.mxu0 %v106
    %231 = vmatpush.msra.mxu0 %v102
    %232 = vmatpush.msra.mxu0 %v98
    %233 = vmatpush.msra.mxu0 %v94
    %234 = vmatpush.msra.mxu0 %v90
    %235 = vmatpush.msra.mxu0 %v86
    %236 = vmatpush.msra.mxu0 %v82
    %237 = vmatpush.msra.mxu0 %v78
    %238 = vmatpush.msra.mxu0 %v74
    %239 = vmatpush.msra.mxu0 %v70
    %240 = vmatpush.msra.mxu0 %v66
    %241 = vmatpush.msra.mxu0 %v62
    %242 = vmatmul.f32.gmra.mxu0 %v58
    %v243 = vpop.f32.mrf.mxu0
    %v244 = vadd.f32 %v136, %v243
    %245 = vdwg.mxu0
    %246 = vmatpush.msra.mxu0 0.0
    %247 = vmatpush.msra.mxu0 0.0
    %248 = vmatpush.msra.mxu0 0.0
    %249 = vmatpush.msra.mxu0 0.0
    %250 = vmatpush.msra.mxu0 0.0
    %251 = vmatpush.msra.mxu0 0.0
    %252 = vmatpush.msra.mxu0 0.0
    %253 = vmatpush.msra.mxu0 0.0
    %254 = vmatpush.msra.mxu0 0.0
    %255 = vmatpush.msra.mxu0 0.0
    %256 = vmatpush.msra.mxu0 0.0
    %257 = vmatpush.msra.mxu0 0.0
    %258 = vmatpush.msra.mxu0 0.0
    %259 = vmatpush.msra.mxu0 0.0
    %260 = vmatpush.msra.mxu0 %v130
    %261 = vmatpush.msra.mxu0 %v126
    %262 = vmatmul.f32.gmra.mxu0 %v144
    %v263 = vpop.f32.mrf.mxu0
    %v264 = vadd.f32 %v244, %v263
    %265 = vdwg.mxu0
    %266 = vmatpush.msra.mxu0 %v123
    %267 = vmatpush.msra.mxu0 %v119
    %268 = vmatpush.msra.mxu0 %v115
    %269 = vmatpush.msra.mxu0 %v111
    %270 = vmatpush.msra.mxu0 %v107
    %271 = vmatpush.msra.mxu0 %v103
    %272 = vmatpush.msra.mxu0 %v99
    %273 = vmatpush.msra.mxu0 %v95
    %274 = vmatpush.msra.mxu0 %v91
    %275 = vmatpush.msra.mxu0 %v87
    %276 = vmatpush.msra.mxu0 %v83
    %277 = vmatpush.msra.mxu0 %v79
    %278 = vmatpush.msra.mxu0 %v75
    %279 = vmatpush.msra.mxu0 %v71
    %280 = vmatpush.msra.mxu0 %v67
    %281 = vmatpush.msra.mxu0 %v63
    %282 = vmatmul.f32.gmra.mxu0 %v58
    %v283 = vpop.f32.mrf.mxu0
    %v284 = vadd.f32 %v137, %v283
    %285 = vdwg.mxu0
    %286 = vmatpush.msra.mxu0 0.0
    %287 = vmatpush.msra.mxu0 0.0
    %288 = vmatpush.msra.mxu0 0.0
    %289 = vmatpush.msra.mxu0 0.0
    %290 = vmatpush.msra.mxu0 0.0
    %291 = vmatpush.msra.mxu0 0.0
    %292 = vmatpush.msra.mxu0 0.0
    %293 = vmatpush.msra.mxu0 0.0
    %294 = vmatpush.msra.mxu0 0.0
    %295 = vmatpush.msra.mxu0 0.0
    %296 = vmatpush.msra.mxu0 0.0
    %297 = vmatpush.msra.mxu0 0.0
    %298 = vmatpush.msra.mxu0 0.0
    %299 = vmatpush.msra.mxu0 0.0
    %300 = vmatpush.msra.mxu0 %v131
    %301 = vmatpush.msra.mxu0 %v127
    %302 = vmatmul.f32.gmra.mxu0 %v144
    %v303 = vpop.f32.mrf.mxu0
    %v304 = vadd.f32 %v284, %v303
    %305 = vdwg.mxu0
    %v306 = vxor.u32 %v184, 2147483648
    %v307 = vmul.f32 %v306, 1.442695
    %v308 = vpow.pop %v307
    %v309 = vadd.f32 %v308, 1.0
    %v310 = vrcp.pop %v309
    %v311 = vmul.f32 %v309, %v310
    %v312 = vsub.f32 1.0, %v311
    %v313 = vmul.f32 %v310, %v312
    %v314 = vadd.f32 %v310, %v313
    %vm315 = vweird.f32 %v309
    %vm316 = vweird.f32 %v310
    %vm317 = vmor %vm315, %vm316
    %v318 = vsel %vm317, %v310, %v314
    %v319 = vand.u32 2147483647, %v309
    %vm320 = vcmp.eq.f32.partialorder %v319, 8.507059e+37
    %v321 = vand.u32 %v309, 2147483648
    %v322 = vor.u32 1.1754944e-38, %v321
    %v323 = vsel %vm320, %v322, %v318
    %v324 = vmul.f32 1.0, %v323
    %v325 = vxor.u32 %v224, 2147483648
    %v326 = vmul.f32 %v325, 1.442695
    %v327 = vpow.pop %v326
    %v328 = vadd.f32 %v327, 1.0
    %v329 = vrcp.pop %v328
    %v330 = vmul.f32 %v328, %v329
    %v331 = vsub.f32 1.0, %v330
    %v332 = vmul.f32 %v329, %v331
    %v333 = vadd.f32 %v329, %v332
    %vm334 = vweird.f32 %v328
    %vm335 = vweird.f32 %v329
    %vm336 = vmor %vm334, %vm335
    %v337 = vsel %vm336, %v329, %v333
    %v338 = vand.u32 2147483647, %v328
    %vm339 = vcmp.eq.f32.partialorder %v338, 8.507059e+37
    %v340 = vand.u32 %v328, 2147483648
    %v341 = vor.u32 1.1754944e-38, %v340
    %v342 = vsel %vm339, %v341, %v337
    %v343 = vmul.f32 1.0, %v342
    %v344 = vtanh.pop %v264
    %v345 = vxor.u32 %v304, 2147483648
    %v346 = vmul.f32 %v345, 1.442695
    %v347 = vpow.pop %v346
    %v348 = vadd.f32 %v347, 1.0
    %v349 = vrcp.pop %v348
    %v350 = vmul.f32 %v348, %v349
    %v351 = vsub.f32 1.0, %v350
    %v352 = vmul.f32 %v349, %v351
    %v353 = vadd.f32 %v349, %v352
    %vm354 = vweird.f32 %v348
    %vm355 = vweird.f32 %v349
    %vm356 = vmor %vm354, %vm355
    %v357 = vsel %vm356, %v349, %v353
    %v358 = vand.u32 2147483647, %v348
    %vm359 = vcmp.eq.f32.partialorder %v358, 8.507059e+37
    %v360 = vand.u32 %v348, 2147483648
    %v361 = vor.u32 1.1754944e-38, %v360
    %v362 = vsel %vm359, %v361, %v357
    %v363 = vmul.f32 1.0, %v362
    %v364 = vld [vmem:[%s1] sm:$0xff]
    %v365 = vmul.f32 %v343, %v364
    %v366 = vmul.f32 %v324, %v344
    %v367 = vadd.f32 %v365, %v366
    %v368 = vtanh.pop %v367
    %v369 = vmul.f32 %v363, %v368
    %370 = vst [vmem:[%s8] sm:$0xff] %v367
    %371 = vst [vmem:[%s7] sm:$0xff] %v369
    %v372 = vld [vmem:[#allocation4] sm:$0xff]
    %v373 = vld [vmem:[#allocation4 + $0x8] sm:$0xff]
    %v374 = vld [vmem:[#allocation4 + $0x10] sm:$0xff]
    %v375 = vld [vmem:[#allocation4 + $0x18] sm:$0xff]
    %v376 = vld [vmem:[#allocation4 + $0x20] sm:$0xff]
    %v377 = vld [vmem:[#allocation4 + $0x28] sm:$0xff]
    %v378 = vld [vmem:[#allocation4 + $0x30] sm:$0xff]
    %v379 = vld [vmem:[#allocation4 + $0x38] sm:$0xff]
    %v380 = vld [vmem:[#allocation4 + $0x40] sm:$0xff]
    %v381 = vld [vmem:[#allocation4 + $0x48] sm:$0xff]
    %v382 = vld [vmem:[#allocation4 + $0x50] sm:$0xff]
    %v383 = vld [vmem:[#allocation4 + $0x58] sm:$0xff]
    %v384 = vld [vmem:[#allocation4 + $0x60] sm:$0xff]
    %v385 = vld [vmem:[#allocation4 + $0x68] sm:$0xff]
    %v386 = vld [vmem:[#allocation4 + $0x70] sm:$0xff]
    %v387 = vld [vmem:[#allocation4 + $0x78] sm:$0xff]
    %v388 = vld [vmem:[%s5] sm:$0x1]
    %v390 = vperm.slane %v388, 0
    %392 = vmatpush.msra.mxu0 %v387
    %393 = vmatpush.msra.mxu0 %v386
    %394 = vmatpush.msra.mxu0 %v385
    %395 = vmatpush.msra.mxu0 %v384
    %396 = vmatpush.msra.mxu0 %v383
    %397 = vmatpush.msra.mxu0 %v382
    %398 = vmatpush.msra.mxu0 %v381
    %399 = vmatpush.msra.mxu0 %v380
    %400 = vmatpush.msra.mxu0 %v379
    %401 = vmatpush.msra.mxu0 %v378
    %402 = vmatpush.msra.mxu0 %v377
    %403 = vmatpush.msra.mxu0 %v376
    %404 = vmatpush.msra.mxu0 %v375
    %405 = vmatpush.msra.mxu0 %v374
    %406 = vmatpush.msra.mxu0 %v373
    %407 = vmatpush.msra.mxu0 %v372
    %408 = vmatmul.f32.gmra.mxu0 %v369
    %v409 = vpop.f32.mrf.mxu0
    %v410 = vadd.f32 %v390, %v409
    %411 = vdwg.mxu0
    %412 = vst [vmem:[%s6] sm:$0xff] %v410
    // Predicated region
    $region34: #{decoder_forward.1} parent=1 // pred_check
      _
    $region35: #{decoder_forward.1} parent=1 // pred_check_branch
      %414 = sbr.rel (0) target = $region37
    $region36: #{decoder_forward.1} parent=1 // pred_region
      _
    $region37: #{decoder_forward.1} parent=1 // pred_fallthru
      _
    // Predicated region
    $region38: #{decoder_forward.1} parent=1 // pred_check
      _
    $region39: #{decoder_forward.1} parent=1 // pred_check_branch
      %416 = sbr.rel (0) target = $region41
    $region40: #{decoder_forward.1} parent=1 // pred_region
      _
    $region41: #{decoder_forward.1} parent=1 // pred_fallthru
      _
    // Predicated region
    $region42: #{decoder_forward.1} parent=1 // pred_check
      _
    $region43: #{decoder_forward.1} parent=1 // pred_check_branch
      %418 = sbr.rel (0) target = $region45
    $region44: #{decoder_forward.1} parent=1 // pred_region
      _
    $region45: #{decoder_forward.1} parent=1 // pred_fallthru
      _
    // Predicated region
    $region46: #{decoder_forward.1} parent=1 // pred_check
      _
    $region47: #{decoder_forward.1} parent=1 // pred_check_branch
      %420 = sbr.rel (0) target = $region49
    $region48: #{decoder_forward.1} parent=1 // pred_region
      _
    $region49: #{decoder_forward.1} parent=1 // pred_fallthru
      _
    // Predicated region
    $region50: #{decoder_forward.1} parent=1 // pred_check
      _
    $region51: #{decoder_forward.1} parent=1 // pred_check_branch
      %422 = sbr.rel (0) target = $region53
    $region52: #{decoder_forward.1} parent=1 // pred_region
      _
    $region53: #{decoder_forward.1} parent=1 // pred_fallthru
      _
    // Predicated region
    $region54: #{decoder_forward.1} parent=1 // pred_check
      _
    $region55: #{decoder_forward.1} parent=1 // pred_check_branch
      %424 = sbr.rel (0) target = $region57
    $region56: #{decoder_forward.1} parent=1 // pred_region
      _
    $region57: #{decoder_forward.1} parent=1 // pred_fallthru
      _
    %425 = vsyncpa [#allocation3], 1
    %426 = vsyncpa [#allocation5], 1

</llo_original>
